<compile_context>
chip_gen: v6e
topology: v6e:2x2x1
jax: 0.10.0
libtpu: 0.0.40
codegen_flags: <defaults>
</compile_context>

<pallas_src>
import jax
import jax.numpy as jnp
from jax.experimental import pallas as pl
from jax.experimental.pallas import tpu as pltpu

EPS = 1e-5

_LANE = 128
_VMEM_TILE_BUDGET = 48 * 1024 * 1024   # conservative: fits v7x 64 MiB VMEM
_VMEM_LIMIT_BYTES = 64 * 1024 * 1024


def _bn_kernel(x_ref, gamma_ref, beta_ref, o_ref):
    # x_ref:     (N, TD)  all rows (batch*seq) for a tile of TD channels
    # gamma_ref: (1, TD)
    # beta_ref:  (1, TD)
    # o_ref:     (N, TD)
    x = x_ref[...].astype(jnp.float32)
    n = x.shape[0]
    inv_n = 1.0 / n

    # Per-channel mean / biased variance over the (batch*seq) rows.
    mean = jnp.sum(x, axis=0, keepdims=True) * inv_n          # (1, TD)
    xc = x - mean
    var = jnp.sum(xc * xc, axis=0, keepdims=True) * inv_n     # (1, TD)
    inv_std = jax.lax.rsqrt(var + EPS)                        # EUP path

    # Fold affine into per-channel scale/shift (computed once per tile on
    # (1, TD) vectors), then one fused mul-add over the (N, TD) tile.
    gamma = gamma_ref[...].astype(jnp.float32)
    beta = beta_ref[...].astype(jnp.float32)
    scale = inv_std * gamma                                   # (1, TD)
    shift = beta - mean * scale                               # (1, TD)

    o_ref[...] = (x * scale + shift).astype(o_ref.dtype)


def _choose_tile_d(n_rows, d_pad, in_bytes, out_bytes):
    """Largest lane-aligned channel tile whose double-buffered DMA tiles plus
    an f32 compute copy fit the conservative VMEM budget."""
    for td in (2048, 1024, 512, 256, 128):
        if d_pad % td != 0:
            continue
        need = 2 * n_rows * td * (in_bytes + out_bytes)  # 2x: double-buffering
        need += n_rows * td * 4                          # f32 compute copy
        if need <= _VMEM_TILE_BUDGET:
            return td
    return 128


def normalization_forward(x, gamma, beta):
    """x: (B, S, D); gamma, beta: (D,).  Returns (B, S, D)."""
    B, S, D = x.shape
    N = B * S

    # Lane-dense channel axis: pad D up to a multiple of 128.
    d_pad = ((D + _LANE - 1) // _LANE) * _LANE
    x2 = x.reshape(N, D)
    g2 = gamma.reshape(1, D)
    b2 = beta.reshape(1, D)
    if d_pad != D:
        pad = d_pad - D
        x2 = jnp.pad(x2, ((0, 0), (0, pad)))
        g2 = jnp.pad(g2, ((0, 0), (0, pad)))   # gamma=0 -> padded output is 0
        b2 = jnp.pad(b2, ((0, 0), (0, pad)))

    in_bytes = jnp.dtype(x.dtype).itemsize
    out_bytes = in_bytes
    td = _choose_tile_d(N, d_pad, in_bytes, out_bytes)
    grid = (d_pad // td,)

    out = pl.pallas_call(
        _bn_kernel,
        out_shape=jax.ShapeDtypeStruct((N, d_pad), x.dtype),
        grid_spec=pltpu.PrefetchScalarGridSpec(
            num_scalar_prefetch=0,
            grid=grid,
            in_specs=[
                pl.BlockSpec((N, td), lambda j: (0, j)),
                pl.BlockSpec((1, td), lambda j: (0, j)),
                pl.BlockSpec((1, td), lambda j: (0, j)),
            ],
            out_specs=pl.BlockSpec((N, td), lambda j: (0, j)),
        ),
        compiler_params=pltpu.CompilerParams(
            dimension_semantics=("parallel",),
            vmem_limit_bytes=_VMEM_LIMIT_BYTES,
        ),
    )(x2, g2, b2)

    if d_pad != D:
        out = out[:, :D]
    return out.reshape(B, S, D)


def _reference(x, gamma, beta):
    # Pure-JAX reference of training-mode BatchNorm1d over the channel dim D.
    xf = x.astype(jnp.float32)
    mean = jnp.mean(xf, axis=(0, 1), keepdims=True)
    var = jnp.mean((xf - mean) ** 2, axis=(0, 1), keepdims=True)
    y = (xf - mean) / jnp.sqrt(var + EPS)
    return (y * gamma + beta).astype(x.dtype)


if __name__ == "__main__":
    key = jax.random.PRNGKey(0)
    kx, kg, kb = jax.random.split(key, 3)

    B, S, D = 2, 8, 32  # batch, seq, embedding_dim
    x = jax.random.normal(kx, (B, S, D), dtype=jnp.float32)
    # Deterministic "affine" parameters (BatchNorm1d weight/bias).
    gamma = 1.0 + 0.1 * jax.random.normal(kg, (D,), dtype=jnp.float32)
    beta = 0.1 * jax.random.normal(kb, (D,), dtype=jnp.float32)

    out = normalization_forward(x, gamma, beta)
    out = jax.block_until_ready(out)

    ref = _reference(x, gamma, beta)
    assert out.shape == (B, S, D)
    assert jnp.allclose(out, ref, atol=1e-5, rtol=1e-5), "mismatch vs reference"

    print("KERNEL_OK")
</pallas_src>

<mosaic_0001>
module attributes {stable_mosaic.version = 11 : i64} {
  func.func @_bn_kernel(%arg0: i32, %arg1: memref<16x128xf32, #tpu.memory_space<vmem>>, %arg2: memref<1x128xf32, #tpu.memory_space<vmem>>, %arg3: memref<1x128xf32, #tpu.memory_space<vmem>>, %arg4: memref<16x128xf32, #tpu.memory_space<vmem>>) attributes {dimension_semantics = [#tpu.dimension_semantics<parallel>], iteration_bounds = array<i64: 1>, scalar_prefetch = 0 : i64, scratch_operands = 0 : i64, tpu.core_type = #tpu.core_type<tc>, window_params = [{transform_indices = @transform_0, window_bounds = array<i64: 16, 128>}, {transform_indices = @transform_1, window_bounds = array<i64: 1, 128>}, {transform_indices = @transform_2, window_bounds = array<i64: 1, 128>}, {transform_indices = @transform_3, window_bounds = array<i64: 16, 128>}]} {
    %c0 = arith.constant 0 : index
    %c0_0 = arith.constant 0 : index
    %0 = vector.load %arg1[%c0, %c0_0] : memref<16x128xf32, #tpu.memory_space<vmem>>, vector<16x128xf32>
    %cst = arith.constant dense<0.000000e+00> : vector<128xf32>
    %1 = vector.multi_reduction <add>, %0, %cst [0] : vector<16x128xf32> to vector<128xf32>
    %2 = vector.shape_cast %1 : vector<128xf32> to vector<1x128xf32>
    %cst_1 = arith.constant 6.250000e-02 : f32
    %3 = vector.broadcast %cst_1 : f32 to vector<1x128xf32>
    %4 = arith.mulf %2, %3 : vector<1x128xf32>
    %5 = vector.broadcast %4 : vector<1x128xf32> to vector<16x128xf32>
    %6 = arith.subf %0, %5 : vector<16x128xf32>
    %7 = arith.mulf %6, %6 : vector<16x128xf32>
    %cst_2 = arith.constant dense<0.000000e+00> : vector<128xf32>
    %8 = vector.multi_reduction <add>, %7, %cst_2 [0] : vector<16x128xf32> to vector<128xf32>
    %9 = vector.shape_cast %8 : vector<128xf32> to vector<1x128xf32>
    %cst_3 = arith.constant 6.250000e-02 : f32
    %10 = vector.broadcast %cst_3 : f32 to vector<1x128xf32>
    %11 = arith.mulf %9, %10 : vector<1x128xf32>
    %cst_4 = arith.constant 9.99999974E-6 : f32
    %12 = vector.broadcast %cst_4 : f32 to vector<1x128xf32>
    %13 = arith.addf %11, %12 : vector<1x128xf32>
    %14 = math.rsqrt %13 : vector<1x128xf32>
    %c0_5 = arith.constant 0 : index
    %c0_6 = arith.constant 0 : index
    %15 = vector.load %arg2[%c0_5, %c0_6] : memref<1x128xf32, #tpu.memory_space<vmem>>, vector<1x128xf32>
    %c0_7 = arith.constant 0 : index
    %c0_8 = arith.constant 0 : index
    %16 = vector.load %arg3[%c0_7, %c0_8] : memref<1x128xf32, #tpu.memory_space<vmem>>, vector<1x128xf32>
    %17 = arith.mulf %14, %15 : vector<1x128xf32>
    %18 = arith.mulf %4, %17 : vector<1x128xf32>
    %19 = arith.subf %16, %18 : vector<1x128xf32>
    %20 = vector.broadcast %17 : vector<1x128xf32> to vector<16x128xf32>
    %21 = arith.mulf %0, %20 : vector<16x128xf32>
    %22 = vector.broadcast %19 : vector<1x128xf32> to vector<16x128xf32>
    %23 = arith.addf %21, %22 : vector<16x128xf32>
    %c0_9 = arith.constant 0 : index
    %c0_10 = arith.constant 0 : index
    %24 = vector.load %arg4[%c0_9, %c0_10] : memref<16x128xf32, #tpu.memory_space<vmem>>, vector<16x128xf32>
    tpu.vector_store %arg4[%c0_9, %c0_10], %23 {strides = array<i32>} : memref<16x128xf32, #tpu.memory_space<vmem>>, vector<16x128xf32>,
    return
  }
  func.func @transform_0(%arg0: i32) -> (i32, i32) {
    %c0_i32 = arith.constant 0 : i32
    %c0_i32_0 = arith.constant 0 : i32
    return %c0_i32, %arg0 : i32, i32
  }
  func.func @transform_1(%arg0: i32) -> (i32, i32) {
    %c0_i32 = arith.constant 0 : i32
    %c0_i32_0 = arith.constant 0 : i32
    return %c0_i32, %arg0 : i32, i32
  }
  func.func @transform_2(%arg0: i32) -> (i32, i32) {
    %c0_i32 = arith.constant 0 : i32
    %c0_i32_0 = arith.constant 0 : i32
    return %c0_i32, %arg0 : i32, i32
  }
  func.func @transform_3(%arg0: i32) -> (i32, i32) {
    %c0_i32 = arith.constant 0 : i32
    %c0_i32_0 = arith.constant 0 : i32
    return %c0_i32, %arg0 : i32, i32
  }
}

</mosaic_0001>

<llo_original>
// kernel: tpu_custom_call.1
$region0: #{tpu_custom_call.1}
  #allocation0 [shape = 'u32[]', space=smem, size = 0x4, offset = 0x4, fixed_abs, tag = 'smem constant byte address 0x4 - core index']
  #allocation1 [shape = 'u32[144,128]{1,0:T(1,128)}', space=vmem, size = 0x12000, scoped, tag = 'internal scratch']
  %s0 = inlined_call_operand.hbm [shape: f32[16,128], index: 0, kind: input, shape index: {}]
  %s1 = inlined_call_operand.vmem [shape: f32[1,128], index: 1, kind: input, shape index: {}]
  %s2 = inlined_call_operand.vmem [shape: f32[1,128], index: 2, kind: input, shape index: {}]
  %s3 = inlined_call_operand.hbm [shape: f32[16,128], index: 3, kind: output, shape index: {}]
  %s4 = sld [smem:[#allocation0]]
  $region26: #{tpu_custom_call.1} parent=0
    _
  %s6 = ssub.s32 1, %s4
  %s7 = scalar_select 0, %s6, %s4
  $region1: #{tpu_custom_call.1} parent=0
    #allocation2 [shape = 'u8[8192]{0}', space=vmem, size = 0x2000, scoped, tag = 'input window, operand 0, single buffered']
    #allocation3 [shape = 's32[1]{0}', space=sflag, size = 0x4, scoped, tag = 'scoped memory for tpu_custom_call.1']
    #allocation4 [shape = 's32[1]{0}', space=sflag, size = 0x4, scoped, tag = 'scoped memory for tpu_custom_call.1']
    #allocation5 [shape = 'u8[8192]{0}', space=vmem, size = 0x2000, scoped, tag = 'output window, operand 0, single buffered']
    %8 = vsyncpa [#allocation3], 0
    %9 = vsyncpa [#allocation4], 0
    // Predicated region
    $region2: #{tpu_custom_call.1} parent=1 // pred_check
      _
    $region3: #{tpu_custom_call.1} parent=1 // pred_check_branch
      %11 = sbr.rel (0) target = $region5
    $region4: #{tpu_custom_call.1} parent=1 // pred_region
      %s13 = ssub.s32 256, 256
      %14 = vsyncadd [#allocation3], %s13
      %s15 = sshll.u32 [#allocation2], 4
      %s16 = int_to_ptr.vmem [resolvable:$true] %s15
      %21 = dma.hbm_to_vmem [thread:$0]  %s0, 256, %s16, [#allocation3], 128, 128, 8
    $region5: #{tpu_custom_call.1} parent=1 // pred_fallthru
      _
    // Predicated region
    $region6: #{tpu_custom_call.1} parent=1 // pred_check
      _
    $region7: #{tpu_custom_call.1} parent=1 // pred_check_branch
      %23 = sbr.rel (0) target = $region9
    $region8: #{tpu_custom_call.1} parent=1 // pred_region
      _
    $region9: #{tpu_custom_call.1} parent=1 // pred_fallthru
      _
    // Predicated region
    $region10: #{tpu_custom_call.1} parent=1 // pred_check
      _
    $region11: #{tpu_custom_call.1} parent=1 // pred_check_branch
      %25 = sbr.rel (0) target = $region13
    $region12: #{tpu_custom_call.1} parent=1 // pred_region
      _
    $region13: #{tpu_custom_call.1} parent=1 // pred_fallthru
      _
    // Predicated region
    $region14: #{tpu_custom_call.1} parent=1 // pred_check
      _
    $region15: #{tpu_custom_call.1} parent=1 // pred_check_branch
      %27 = sbr.rel (0) target = $region17
    $region16: #{tpu_custom_call.1} parent=1 // pred_region
      %28 = dma.done [#allocation3], 256
    $region17: #{tpu_custom_call.1} parent=1 // pred_fallthru
      _
    %v29 = vld [vmem:[#allocation2] sm:$0xff]
    %v30 = vld [vmem:[#allocation2 + $0x8] sm:$0xff]
    %v31 = vadd.f32 %v29, %v30
    %v32 = vrot.slane %v31, 4
    %v33 = vadd.f32 %v31, %v32
    %v34 = vrot.slane %v33, 2
    %v35 = vadd.f32 %v33, %v34
    %v36 = vrot.slane %v35, 1
    %v37 = vadd.f32 %v35, %v36
    %v38 = vmul.f32 %v37, 0.0625
    %v39 = vsub.f32 %v29, %v38
    %v40 = vsub.f32 %v30, %v38
    %v41 = vmul.f32 %v39, %v39
    %v42 = vmul.f32 %v40, %v40
    %v43 = vadd.f32 %v41, %v42
    %v44 = vrot.slane %v43, 4
    %v45 = vadd.f32 %v43, %v44
    %v46 = vrot.slane %v45, 2
    %v47 = vadd.f32 %v45, %v46
    %v48 = vrot.slane %v47, 1
    %v49 = vadd.f32 %v47, %v48
    %v50 = vmul.f32 %v49, 0.0625
    %v51 = vadd.f32 %v50, 1e-05
    %v52 = vrsqrt.pop %v51
    %v53 = vld [vmem:[%s1] sm:$0x1]
    %v54 = vld [vmem:[%s2] sm:$0x1]
    %v55 = vmul.f32 %v52, %v53
    %v56 = vmul.f32 %v38, %v55
    %v57 = vsub.f32 %v54, %v56
    %v58 = vlaneseq
    %v59 = vshrl.u32 %v58, 7
    %v60 = vsub.s32 0, %v59
    %v61 = vrot.slane %v55, %v60
    %v62 = vmul.f32 %v29, %v61
    %v63 = vmul.f32 %v30, %v61
    %v65 = vlaneseq
    %v66 = vshrl.u32 %v65, 7
    %v67 = vsub.s32 0, %v66
    %v68 = vrot.slane %v57, %v67
    %v70 = vadd.f32 %v62, %v68
    %v71 = vadd.f32 %v63, %v68
    %72 = vst [vmem:[#allocation5] sm:$0xff] %v70
    %73 = vst [vmem:[#allocation5 + $0x8] sm:$0xff] %v71
    // Predicated region
    $region18: #{tpu_custom_call.1} parent=1 // pred_check
      _
    $region19: #{tpu_custom_call.1} parent=1 // pred_check_branch
      %75 = sbr.rel (0) target = $region21
    $region20: #{tpu_custom_call.1} parent=1 // pred_region
      %s77 = ssub.s32 256, 256
      %78 = vsyncadd [#allocation4], %s77
      %s79 = sshll.u32 [#allocation5], 4
      %s80 = int_to_ptr.vmem [resolvable:$true] %s79
      %85 = dma.vmem_to_hbm [thread:$0]  %s80, 256, %s3, [#allocation4], 128, 128, 8
    $region21: #{tpu_custom_call.1} parent=1 // pred_fallthru
      _
    // Predicated region
    $region22: #{tpu_custom_call.1} parent=1 // pred_check
      _
    $region23: #{tpu_custom_call.1} parent=1 // pred_check_branch
      %87 = sbr.rel (0) target = $region25
    $region24: #{tpu_custom_call.1} parent=1 // pred_region
      %88 = dma.done [#allocation4], 256
    $region25: #{tpu_custom_call.1} parent=1 // pred_fallthru
      _
    %89 = vsyncpa [#allocation3], 1
    %90 = vsyncpa [#allocation4], 1

</llo_original>
